<compile_context>
chip_gen: v7x
topology: tpu7x:2x2x1
jax: 0.10.0
libtpu: 0.0.40
codegen_flags: <defaults>
</compile_context>

<pallas_src>
import jax
import jax.numpy as jnp
from jax.experimental import pallas as pl
from jax.experimental.pallas import tpu as pltpu

N_CLS_PAD = 128  # lane-dense padded class axis


# ----------------------------- Pallas kernel -------------------------------
def enc_cytoself_kernel(x_ref, w_ref, b_ref, out_ref):
    # x_ref : (TILE_B, D_in)   f32 flattened input tile (cast to bf16 here)
    # w_ref : (D_in, 128)      bf16 fused weight (classes padded to 128 lanes)
    # b_ref : (1, 128)         f32 fused bias (-1e30 on padded lanes)
    # out_ref: (TILE_B, 128)   f32 log-probabilities (padded lanes garbage)
    x_bf16 = x_ref[...].astype(jnp.bfloat16)     # VPU cast, hidden under DMA
    logits = jnp.dot(x_bf16, w_ref[...],
                     preferred_element_type=jnp.float32) + b_ref[...]

    # LogSoftmax over the (padded) class axis.  Padded lanes carry -1e30 so
    # they never win the max and contribute exp(...) == 0 to the sum.
    m = jnp.max(logits, axis=-1, keepdims=True)
    shifted = logits - m
    lse = jnp.log(jnp.sum(jnp.exp(shifted), axis=-1, keepdims=True))
    out_ref[...] = (shifted - lse).astype(out_ref.dtype)


# ------------------------------- wrapper ------------------------------------
def _round_up(x, m):
    return ((x + m - 1) // m) * m


def _choose_tile_b(batch, d_in, max_tile_b=2048,
                   vmem_budget_bytes=24 * 1024 * 1024):
    """Batch tile: multiple of 16, VMEM-safe, >=2 grid programs when possible."""
    # Double-buffered f32 x tile + f32 out tile per block:
    #   2 * tile_b * 4 * (d_in + N_CLS_PAD)  bytes
    cap_vmem = vmem_budget_bytes // (2 * 4 * (d_in + N_CLS_PAD))
    # v7x megacore: keep >= 2 programs so ("parallel",) shards across both TCs.
    cap_split = _round_up(pl.cdiv(batch, 2), 16)
    tile_b = min(max_tile_b, cap_vmem, cap_split)
    tile_b = max(16, (tile_b // 16) * 16)
    return tile_b


def prepare_enc_params(w1_sn, b1, w2, b2):
    """One-time parameter prep: fuse the two Linears and pad the class axis."""
    n_cls = w2.shape[0]
    d_in = w1_sn.shape[1]
    w_fused = (w1_sn.T @ w2.T).astype(jnp.float32)            # (D_in, n_cls)
    b_fused = (b1 @ w2.T + b2).astype(jnp.float32)            # (n_cls,)

    w_pad = jnp.zeros((d_in, N_CLS_PAD), jnp.float32).at[:, :n_cls].set(w_fused)
    b_pad = jnp.full((1, N_CLS_PAD), -1e30, jnp.float32).at[0, :n_cls].set(b_fused)
    return w_pad.astype(jnp.bfloat16), b_pad, n_cls


def enc_cytoself_forward(x_nchw, w_pad_bf16, b_pad, n_cls, max_tile_b=2048):
    """x_nchw: (B, C, H, W) float32.  Returns (B, n_cls) log-probs (float32)."""
    B = x_nchw.shape[0]
    x_flat = x_nchw.reshape(B, -1)                 # row-major, == torch .view
    d_in = x_flat.shape[1]

    tile_b = _choose_tile_b(B, d_in, max_tile_b)
    grid = (pl.cdiv(B, tile_b),)                   # ragged tail block only

    bytes_accessed = (B * d_in * 4                 # x (f32, read once)
                      + d_in * N_CLS_PAD * 2       # fused weight (bf16)
                      + N_CLS_PAD * 4              # bias
                      + B * N_CLS_PAD * 4)         # output

    out = pl.pallas_call(
        enc_cytoself_kernel,
        out_shape=jax.ShapeDtypeStruct((B, N_CLS_PAD), jnp.float32),
        grid=grid,
        in_specs=[
            pl.BlockSpec((tile_b, d_in), lambda i: (i, 0)),       # x tile
            pl.BlockSpec((d_in, N_CLS_PAD), lambda i: (0, 0)),    # resident W
            pl.BlockSpec((1, N_CLS_PAD), lambda i: (0, 0)),       # resident b
        ],
        out_specs=pl.BlockSpec((tile_b, N_CLS_PAD), lambda i: (i, 0)),
        compiler_params=pltpu.CompilerParams(
            dimension_semantics=("parallel",),
            vmem_limit_bytes=32 * 1024 * 1024,
        ),
        cost_estimate=pl.CostEstimate(
            flops=2 * B * d_in * N_CLS_PAD,
            transcendentals=B * N_CLS_PAD,
            bytes_accessed=bytes_accessed,
        ),
    )(x_flat, w_pad_bf16, b_pad)

    return out[:, :n_cls]


# --------------------------- parameter glue --------------------------------
def spectral_normalize(w, key, n_power_iterations=1, eps=1e-12):
    """One power-iteration spectral norm, mirroring torch.nn.utils.spectral_norm."""
    u = jax.random.normal(key, (w.shape[0],), dtype=w.dtype)
    u = u / (jnp.linalg.norm(u) + eps)
    v = None
    for _ in range(n_power_iterations):
        v = w.T @ u
        v = v / (jnp.linalg.norm(v) + eps)
        u = w @ v
        u = u / (jnp.linalg.norm(u) + eps)
    sigma = u @ (w @ v)
    return w / sigma


def make_params(key, d_in, n_latent, n_cls=19):
    k1, k2, k3, k4, k5 = jax.random.split(key, 5)
    w1 = jax.random.uniform(k1, (n_latent, d_in), jnp.float32, -0.05, 0.05)
    b1 = jax.random.uniform(k2, (n_latent,), jnp.float32, -0.05, 0.05)
    w2 = jax.random.uniform(k3, (n_cls, n_latent), jnp.float32, -0.1, 0.1)
    b2 = jax.random.uniform(k4, (n_cls,), jnp.float32, -0.1, 0.1)
    w1_sn = spectral_normalize(w1, k5)
    return w1_sn, b1, w2, b2


def reference_forward(x_nchw, w1_sn, b1, w2, b2):
    x = x_nchw.reshape(x_nchw.shape[0], -1)
    z = x @ w1_sn.T + b1
    logits = z @ w2.T + b2
    return jax.nn.log_softmax(logits, axis=-1)


# --------------------------------- main -------------------------------------
if __name__ == "__main__":
    # Small shapes consistent with the module: imsize_compressed -> (4, 16, 16)
    # so D_in = 1024 flattened features, n_latent_dim = 32, 19 output classes.
    B, C, H, W = 2, 4, 16, 16
    D_IN = C * H * W          # 1024
    N_LATENT = 32
    N_CLS = 19

    key = jax.random.PRNGKey(0)
    kx, kp = jax.random.split(key)
    x = jax.random.normal(kx, (B, C, H, W), dtype=jnp.float32)
    w1_sn, b1, w2, b2 = make_params(kp, D_IN, N_LATENT, N_CLS)

    # One-time parameter prep (hoisted out of the forward path).
    w_pad_bf16, b_pad, n_cls = prepare_enc_params(w1_sn, b1, w2, b2)
    w_pad_bf16 = jax.block_until_ready(w_pad_bf16)

    out = enc_cytoself_forward(x, w_pad_bf16, b_pad, n_cls)
    out = jax.block_until_ready(out)

    ref = reference_forward(x, w1_sn, b1, w2, b2)
    assert out.shape == (B, N_CLS)
    # bf16 MXU operands (fp32 accumulate) + layer fusion -> modest tolerance.
    assert jnp.allclose(out, ref, atol=3e-2, rtol=3e-2), (
        float(jnp.max(jnp.abs(out - ref))))

    print("KERNEL_OK")
</pallas_src>

<mosaic_0001>
module attributes {stable_mosaic.version = 11 : i64} {
  func.func @enc_cytoself_kernel(%arg0: i32, %arg1: memref<16x1024xf32, #tpu.memory_space<vmem>>, %arg2: memref<1024x128xbf16, #tpu.memory_space<vmem>>, %arg3: memref<1x128xf32, #tpu.memory_space<vmem>>, %arg4: memref<16x128xf32, #tpu.memory_space<vmem>>) attributes {dimension_semantics = [#tpu.dimension_semantics<parallel>], iteration_bounds = array<i64: 1>, scalar_prefetch = 0 : i64, scratch_operands = 0 : i64, tpu.core_type = #tpu.core_type<tc>, window_params = [{transform_indices = @transform_0, window_bounds = array<i64: 16, 1024>}, {pipeline_mode = #tpu.pipeline_mode<synchronous>, transform_indices = @transform_1, window_bounds = array<i64: 1024, 128>}, {pipeline_mode = #tpu.pipeline_mode<synchronous>, transform_indices = @transform_2, window_bounds = array<i64: 1, 128>}, {transform_indices = @transform_3, window_bounds = array<i64: 16, 128>}]} {
    %c0 = arith.constant 0 : index
    %c0_0 = arith.constant 0 : index
    %0 = vector.load %arg1[%c0, %c0_0] : memref<16x1024xf32, #tpu.memory_space<vmem>>, vector<16x1024xf32>
    %1 = arith.truncf %0 : vector<16x1024xf32> to vector<16x1024xbf16>
    %c0_1 = arith.constant 0 : index
    %c0_2 = arith.constant 0 : index
    %2 = vector.load %arg2[%c0_1, %c0_2] : memref<1024x128xbf16, #tpu.memory_space<vmem>>, vector<1024x128xbf16>
    %cst = arith.constant dense<0.000000e+00> : vector<16x128xf32>
    %3 = tpu.matmul %1, %2, %cst {dimension_numbers = #tpu.dot_dimension_numbers<[1], [0], [0], [1], [0, 0, 1, 1], [], []>} : vector<16x1024xbf16>, vector<1024x128xbf16>, vector<16x128xf32> -> vector<16x128xf32>
    %c0_3 = arith.constant 0 : index
    %c0_4 = arith.constant 0 : index
    %4 = vector.load %arg3[%c0_3, %c0_4] : memref<1x128xf32, #tpu.memory_space<vmem>>, vector<1x128xf32>
    %5 = vector.broadcast %4 : vector<1x128xf32> to vector<16x128xf32>
    %6 = arith.addf %3, %5 : vector<16x128xf32>
    %cst_5 = arith.constant dense<0xFF800000> : vector<16xf32>
    %7 = vector.multi_reduction <maximumf>, %6, %cst_5 [1] : vector<16x128xf32> to vector<16xf32>
    %8 = vector.shape_cast %7 : vector<16xf32> to vector<16x1xf32>
    %9 = vector.broadcast %8 : vector<16x1xf32> to vector<16x128xf32>
    %10 = arith.subf %6, %9 : vector<16x128xf32>
    %11 = math.exp %10 : vector<16x128xf32>
    %cst_6 = arith.constant dense<0.000000e+00> : vector<16xf32>
    %12 = vector.multi_reduction <add>, %11, %cst_6 [1] : vector<16x128xf32> to vector<16xf32>
    %13 = vector.shape_cast %12 : vector<16xf32> to vector<16x1xf32>
    %14 = math.log %13 : vector<16x1xf32>
    %15 = vector.broadcast %14 : vector<16x1xf32> to vector<16x128xf32>
    %16 = arith.subf %10, %15 : vector<16x128xf32>
    %c0_7 = arith.constant 0 : index
    %c0_8 = arith.constant 0 : index
    %17 = vector.load %arg4[%c0_7, %c0_8] : memref<16x128xf32, #tpu.memory_space<vmem>>, vector<16x128xf32>
    tpu.vector_store %arg4[%c0_7, %c0_8], %16 {strides = array<i32>} : memref<16x128xf32, #tpu.memory_space<vmem>>, vector<16x128xf32>,
    return
  }
  func.func @transform_0(%arg0: i32) -> (i32, i32) {
    %c0_i32 = arith.constant 0 : i32
    %c0_i32_0 = arith.constant 0 : i32
    return %arg0, %c0_i32 : i32, i32
  }
  func.func @transform_1(%arg0: i32) -> (i32, i32) {
    %c0_i32 = arith.constant 0 : i32
    %c0_i32_0 = arith.constant 0 : i32
    %c0_i32_1 = arith.constant 0 : i32
    return %c0_i32, %c0_i32_0 : i32, i32
  }
  func.func @transform_2(%arg0: i32) -> (i32, i32) {
    %c0_i32 = arith.constant 0 : i32
    %c0_i32_0 = arith.constant 0 : i32
    %c0_i32_1 = arith.constant 0 : i32
    return %c0_i32, %c0_i32_0 : i32, i32
  }
  func.func @transform_3(%arg0: i32) -> (i32, i32) {
    %c0_i32 = arith.constant 0 : i32
    %c0_i32_0 = arith.constant 0 : i32
    return %arg0, %c0_i32 : i32, i32
  }
}

</mosaic_0001>

<llo_original>
// kernel: tpu_custom_call.1
$region0: #{tpu_custom_call.1}
  #allocation0 [shape = 'u32[]', space=smem, size = 0x4, offset = 0x4, fixed_abs, tag = 'smem constant byte address 0x4 - core index']
  #allocation1 [shape = 'u32[144,128]{1,0:T(1,128)}', space=vmem, size = 0x12000, scoped, tag = 'internal scratch']
  %s0 = inlined_call_operand.hbm [shape: f32[2,1024], index: 0, kind: input, shape index: {}]
  %s1 = inlined_call_operand.hbm [shape: bf16[1024,128], index: 1, kind: input, shape index: {}]
  %s2 = inlined_call_operand.vmem [shape: f32[1,128], index: 2, kind: input, shape index: {}]
  %s3 = inlined_call_operand.hbm [shape: f32[2,128], index: 3, kind: output, shape index: {}]
  %s4 = sld [smem:[#allocation0]]
  $region30: #{tpu_custom_call.1} parent=0
    _
  %s6 = ssub.s32 1, %s4
  %s7 = scalar_select 0, %s6, %s4
  $region1: #{tpu_custom_call.1} parent=0
    #allocation2 [shape = 'u8[65536]{0}', space=vmem, size = 0x10000, scoped, tag = 'input window, operand 0, single buffered']
    #allocation3 [shape = 's32[1]{0}', space=sflag, size = 0x4, scoped, tag = 'scoped memory for tpu_custom_call.1']
    #allocation4 [shape = 's32[1]{0}', space=sflag, size = 0x4, scoped, tag = 'scoped memory for tpu_custom_call.1']
    #allocation5 [shape = 'u8[262144]{0}', space=vmem, size = 0x40000, scoped, tag = 'input window, operand 1, single buffered']
    #allocation6 [shape = 's32[1]{0}', space=sflag, size = 0x4, scoped, tag = 'scoped memory for tpu_custom_call.1']
    #allocation7 [shape = 'u8[8192]{0}', space=vmem, size = 0x2000, scoped, tag = 'output window, operand 0, single buffered']
    %8 = vsyncpa [#allocation3], 0
    %9 = vsyncpa [#allocation6], 0
    %10 = vsyncpa [#allocation4], 0
    // Predicated region
    $region2: #{tpu_custom_call.1} parent=1 // pred_check
      _
    $region3: #{tpu_custom_call.1} parent=1 // pred_check_branch
      %12 = sbr.rel (0) target = $region5
    $region4: #{tpu_custom_call.1} parent=1 // pred_region
      %s14 = ssub.s32 2048, 256
      %15 = vsyncadd [#allocation3], %s14
      %s16 = sshll.u32 [#allocation2], 4
      %s17 = int_to_ptr.vmem [resolvable:$true] %s16
      %22 = dma.hbm_to_vmem [thread:$0]  %s0, 256, %s17, [#allocation3], 256, 256, 16
    $region5: #{tpu_custom_call.1} parent=1 // pred_fallthru
      _
    // Predicated region
    $region6: #{tpu_custom_call.1} parent=1 // pred_check
      _
    $region7: #{tpu_custom_call.1} parent=1 // pred_check_branch
      %24 = sbr.rel (0) target = $region9
    $region8: #{tpu_custom_call.1} parent=1 // pred_region
      %s26 = ssub.s32 8192, 8192
      %27 = vsyncadd [#allocation6], %s26
      %s28 = sshll.u32 [#allocation5], 4
      %s29 = int_to_ptr.vmem [resolvable:$true] %s28
      %34 = dma.hbm_to_vmem [thread:$0]  %s1, 8192, %s29, [#allocation6], 64, 64, 4
    $region9: #{tpu_custom_call.1} parent=1 // pred_fallthru
      _
    // Predicated region
    $region10: #{tpu_custom_call.1} parent=1 // pred_check
      _
    $region11: #{tpu_custom_call.1} parent=1 // pred_check_branch
      %36 = sbr.rel (0) target = $region13
    $region12: #{tpu_custom_call.1} parent=1 // pred_region
      _
    $region13: #{tpu_custom_call.1} parent=1 // pred_fallthru
      _
    // Predicated region
    $region14: #{tpu_custom_call.1} parent=1 // pred_check
      _
    $region15: #{tpu_custom_call.1} parent=1 // pred_check_branch
      %38 = sbr.rel (0) target = $region17
    $region16: #{tpu_custom_call.1} parent=1 // pred_region
      %39 = dma.done [#allocation3], 2048
    $region17: #{tpu_custom_call.1} parent=1 // pred_fallthru
      _
    // Predicated region
    $region18: #{tpu_custom_call.1} parent=1 // pred_check
      _
    $region19: #{tpu_custom_call.1} parent=1 // pred_check_branch
      %41 = sbr.rel (0) target = $region21
    $region20: #{tpu_custom_call.1} parent=1 // pred_region
      %42 = dma.done [#allocation6], 8192
    $region21: #{tpu_custom_call.1} parent=1 // pred_fallthru
      _
    %v44 = vld [vmem:[#allocation2] sm:$0xff]
    %v45 = vld [vmem:[#allocation2 + $0x8] sm:$0xff]
    %v46 = vld [vmem:[#allocation2 + $0x10] sm:$0xff]
    %v47 = vld [vmem:[#allocation2 + $0x18] sm:$0xff]
    %v48 = vld [vmem:[#allocation2 + $0x20] sm:$0xff]
    %v49 = vld [vmem:[#allocation2 + $0x28] sm:$0xff]
    %v50 = vld [vmem:[#allocation2 + $0x30] sm:$0xff]
    %v51 = vld [vmem:[#allocation2 + $0x38] sm:$0xff]
    %v52 = vld [vmem:[#allocation2 + $0x40] sm:$0xff]
    %v53 = vld [vmem:[#allocation2 + $0x48] sm:$0xff]
    %v54 = vld [vmem:[#allocation2 + $0x50] sm:$0xff]
    %v55 = vld [vmem:[#allocation2 + $0x58] sm:$0xff]
    %v56 = vld [vmem:[#allocation2 + $0x60] sm:$0xff]
    %v57 = vld [vmem:[#allocation2 + $0x68] sm:$0xff]
    %v58 = vld [vmem:[#allocation2 + $0x70] sm:$0xff]
    %v59 = vld [vmem:[#allocation2 + $0x78] sm:$0xff]
    %v76 = vcombine.low %v44, %v46
    %v77 = vcombine.high %v44, %v46
    %v78 = vcombine.low %v48, %v50
    %v79 = vcombine.high %v48, %v50
    %v81 = vunpack.c.l.s4 1983009808
    %v82 = vunpack.c.0.s8 %v81
    %v83 = vlaneseq
    %v84 = vshrl.u32 %v83, 7
    %v85 = vsub.s32 %v82, %v84
    %v86 = vrot.slane %v76, %v85
    %v88 = vunpack.c.l.s4 1983009808
    %v89 = vunpack.c.0.s8 %v88
    %v90 = vlaneseq
    %v91 = vshrl.u32 %v90, 7
    %v92 = vsub.s32 %v89, %v91
    %v93 = vrot.slane %v77, %v92
    %v95 = vunpack.c.l.s4 1983009808
    %v96 = vunpack.c.0.s8 %v95
    %v97 = vlaneseq
    %v98 = vshrl.u32 %v97, 7
    %v99 = vsub.s32 %v96, %v98
    %v100 = vrot.slane %v78, %v99
    %v102 = vunpack.c.l.s4 1983009808
    %v103 = vunpack.c.0.s8 %v102
    %v104 = vlaneseq
    %v105 = vshrl.u32 %v104, 7
    %v106 = vsub.s32 %v103, %v105
    %v107 = vrot.slane %v79, %v106
    %v108 = vcombine.low %v86, %v100
    %v109 = vcombine.high %v86, %v100
    %v110 = vcombine.low %v93, %v107
    %v111 = vcombine.high %v93, %v107
    %v112 = vcombine.low %v45, %v47
    %v113 = vcombine.high %v45, %v47
    %v114 = vcombine.low %v49, %v51
    %v115 = vcombine.high %v49, %v51
    %v117 = vunpack.c.l.s4 1983009808
    %v118 = vunpack.c.0.s8 %v117
    %v119 = vlaneseq
    %v120 = vshrl.u32 %v119, 7
    %v121 = vsub.s32 %v118, %v120
    %v122 = vrot.slane %v112, %v121
    %v124 = vunpack.c.l.s4 1983009808
    %v125 = vunpack.c.0.s8 %v124
    %v126 = vlaneseq
    %v127 = vshrl.u32 %v126, 7
    %v128 = vsub.s32 %v125, %v127
    %v129 = vrot.slane %v113, %v128
    %v131 = vunpack.c.l.s4 1983009808
    %v132 = vunpack.c.0.s8 %v131
    %v133 = vlaneseq
    %v134 = vshrl.u32 %v133, 7
    %v135 = vsub.s32 %v132, %v134
    %v136 = vrot.slane %v114, %v135
    %v138 = vunpack.c.l.s4 1983009808
    %v139 = vunpack.c.0.s8 %v138
    %v140 = vlaneseq
    %v141 = vshrl.u32 %v140, 7
    %v142 = vsub.s32 %v139, %v141
    %v143 = vrot.slane %v115, %v142
    %v144 = vcombine.low %v122, %v136
    %v145 = vcombine.high %v122, %v136
    %v146 = vcombine.low %v129, %v143
    %v147 = vcombine.high %v129, %v143
    %v148 = vcombine.low %v52, %v54
    %v149 = vcombine.high %v52, %v54
    %v150 = vcombine.low %v56, %v58
    %v151 = vcombine.high %v56, %v58
    %v153 = vunpack.c.l.s4 1983009808
    %v154 = vunpack.c.0.s8 %v153
    %v155 = vlaneseq
    %v156 = vshrl.u32 %v155, 7
    %v157 = vsub.s32 %v154, %v156
    %v158 = vrot.slane %v148, %v157
    %v160 = vunpack.c.l.s4 1983009808
    %v161 = vunpack.c.0.s8 %v160
    %v162 = vlaneseq
    %v163 = vshrl.u32 %v162, 7
    %v164 = vsub.s32 %v161, %v163
    %v165 = vrot.slane %v149, %v164
    %v167 = vunpack.c.l.s4 1983009808
    %v168 = vunpack.c.0.s8 %v167
    %v169 = vlaneseq
    %v170 = vshrl.u32 %v169, 7
    %v171 = vsub.s32 %v168, %v170
    %v172 = vrot.slane %v150, %v171
    %v174 = vunpack.c.l.s4 1983009808
    %v175 = vunpack.c.0.s8 %v174
    %v176 = vlaneseq
    %v177 = vshrl.u32 %v176, 7
    %v178 = vsub.s32 %v175, %v177
    %v179 = vrot.slane %v151, %v178
    %v180 = vcombine.low %v158, %v172
    %v181 = vcombine.high %v158, %v172
    %v182 = vcombine.low %v165, %v179
    %v183 = vcombine.high %v165, %v179
    %v184 = vcombine.low %v53, %v55
    %v185 = vcombine.high %v53, %v55
    %v186 = vcombine.low %v57, %v59
    %v187 = vcombine.high %v57, %v59
    %v189 = vunpack.c.l.s4 1983009808
    %v190 = vunpack.c.0.s8 %v189
    %v191 = vlaneseq
    %v192 = vshrl.u32 %v191, 7
    %v193 = vsub.s32 %v190, %v192
    %v194 = vrot.slane %v184, %v193
    %v196 = vunpack.c.l.s4 1983009808
    %v197 = vunpack.c.0.s8 %v196
    %v198 = vlaneseq
    %v199 = vshrl.u32 %v198, 7
    %v200 = vsub.s32 %v197, %v199
    %v201 = vrot.slane %v185, %v200
    %v203 = vunpack.c.l.s4 1983009808
    %v204 = vunpack.c.0.s8 %v203
    %v205 = vlaneseq
    %v206 = vshrl.u32 %v205, 7
    %v207 = vsub.s32 %v204, %v206
    %v208 = vrot.slane %v186, %v207
    %v210 = vunpack.c.l.s4 1983009808
    %v211 = vunpack.c.0.s8 %v210
    %v212 = vlaneseq
    %v213 = vshrl.u32 %v212, 7
    %v214 = vsub.s32 %v211, %v213
    %v215 = vrot.slane %v187, %v214
    %v216 = vcombine.low %v194, %v208
    %v217 = vcombine.high %v194, %v208
    %v218 = vcombine.low %v201, %v215
    %v219 = vcombine.high %v201, %v215
    %v236 = vpack.c.bf16 %v180, %v108
    %v237 = vpack.c.bf16 %v181, %v109
    %v238 = vpack.c.bf16 %v182, %v110
    %v239 = vpack.c.bf16 %v183, %v111
    %v240 = vpack.c.bf16 %v216, %v144
    %v241 = vpack.c.bf16 %v217, %v145
    %v242 = vpack.c.bf16 %v218, %v146
    %v243 = vpack.c.bf16 %v219, %v147
    %v244 = vld [vmem:[#allocation5] sm:$0xf]
    %v245 = vld [vmem:[#allocation5 + $0x4] sm:$0xf]
    %v246 = vld [vmem:[#allocation5 + $0x8] sm:$0xf]
    %v247 = vld [vmem:[#allocation5 + $0xc] sm:$0xf]
    %v248 = vld [vmem:[#allocation5 + $0x10] sm:$0xf]
    %v249 = vld [vmem:[#allocation5 + $0x14] sm:$0xf]
    %v250 = vld [vmem:[#allocation5 + $0x18] sm:$0xf]
    %v251 = vld [vmem:[#allocation5 + $0x1c] sm:$0xf]
    %v252 = vld [vmem:[#allocation5 + $0x20] sm:$0xf]
    %v253 = vld [vmem:[#allocation5 + $0x24] sm:$0xf]
    %v254 = vld [vmem:[#allocation5 + $0x28] sm:$0xf]
    %v255 = vld [vmem:[#allocation5 + $0x2c] sm:$0xf]
    %v256 = vld [vmem:[#allocation5 + $0x30] sm:$0xf]
    %v257 = vld [vmem:[#allocation5 + $0x34] sm:$0xf]
    %v258 = vld [vmem:[#allocation5 + $0x38] sm:$0xf]
    %v259 = vld [vmem:[#allocation5 + $0x3c] sm:$0xf]
    %v260 = vld [vmem:[#allocation5 + $0x40] sm:$0xf]
    %v261 = vld [vmem:[#allocation5 + $0x44] sm:$0xf]
    %v262 = vld [vmem:[#allocation5 + $0x48] sm:$0xf]
    %v263 = vld [vmem:[#allocation5 + $0x4c] sm:$0xf]
    %v264 = vld [vmem:[#allocation5 + $0x50] sm:$0xf]
    %v265 = vld [vmem:[#allocation5 + $0x54] sm:$0xf]
    %v266 = vld [vmem:[#allocation5 + $0x58] sm:$0xf]
    %v267 = vld [vmem:[#allocation5 + $0x5c] sm:$0xf]
    %v268 = vld [vmem:[#allocation5 + $0x60] sm:$0xf]
    %v269 = vld [vmem:[#allocation5 + $0x64] sm:$0xf]
    %v270 = vld [vmem:[#allocation5 + $0x68] sm:$0xf]
    %v271 = vld [vmem:[#allocation5 + $0x6c] sm:$0xf]
    %v272 = vld [vmem:[#allocation5 + $0x70] sm:$0xf]
    %v273 = vld [vmem:[#allocation5 + $0x74] sm:$0xf]
    %v274 = vld [vmem:[#allocation5 + $0x78] sm:$0xf]
    %v275 = vld [vmem:[#allocation5 + $0x7c] sm:$0xf]
    %v276 = vld [vmem:[#allocation5 + $0x80] sm:$0xf]
    %v277 = vld [vmem:[#allocation5 + $0x84] sm:$0xf]
    %v278 = vld [vmem:[#allocation5 + $0x88] sm:$0xf]
    %v279 = vld [vmem:[#allocation5 + $0x8c] sm:$0xf]
    %v280 = vld [vmem:[#allocation5 + $0x90] sm:$0xf]
    %v281 = vld [vmem:[#allocation5 + $0x94] sm:$0xf]
    %v282 = vld [vmem:[#allocation5 + $0x98] sm:$0xf]
    %v283 = vld [vmem:[#allocation5 + $0x9c] sm:$0xf]
    %v284 = vld [vmem:[#allocation5 + $0xa0] sm:$0xf]
    %v285 = vld [vmem:[#allocation5 + $0xa4] sm:$0xf]
    %v286 = vld [vmem:[#allocation5 + $0xa8] sm:$0xf]
    %v287 = vld [vmem:[#allocation5 + $0xac] sm:$0xf]
    %v288 = vld [vmem:[#allocation5 + $0xb0] sm:$0xf]
    %v289 = vld [vmem:[#allocation5 + $0xb4] sm:$0xf]
    %v290 = vld [vmem:[#allocation5 + $0xb8] sm:$0xf]
    %v291 = vld [vmem:[#allocation5 + $0xbc] sm:$0xf]
    %v292 = vld [vmem:[#allocation5 + $0xc0] sm:$0xf]
    %v293 = vld [vmem:[#allocation5 + $0xc4] sm:$0xf]
    %v294 = vld [vmem:[#allocation5 + $0xc8] sm:$0xf]
    %v295 = vld [vmem:[#allocation5 + $0xcc] sm:$0xf]
    %v296 = vld [vmem:[#allocation5 + $0xd0] sm:$0xf]
    %v297 = vld [vmem:[#allocation5 + $0xd4] sm:$0xf]
    %v298 = vld [vmem:[#allocation5 + $0xd8] sm:$0xf]
    %v299 = vld [vmem:[#allocation5 + $0xdc] sm:$0xf]
    %v300 = vld [vmem:[#allocation5 + $0xe0] sm:$0xf]
    %v301 = vld [vmem:[#allocation5 + $0xe4] sm:$0xf]
    %v302 = vld [vmem:[#allocation5 + $0xe8] sm:$0xf]
    %v303 = vld [vmem:[#allocation5 + $0xec] sm:$0xf]
    %v304 = vld [vmem:[#allocation5 + $0xf0] sm:$0xf]
    %v305 = vld [vmem:[#allocation5 + $0xf4] sm:$0xf]
    %v306 = vld [vmem:[#allocation5 + $0xf8] sm:$0xf]
    %v307 = vld [vmem:[#allocation5 + $0xfc] sm:$0xf]
    %v308 = vld [vmem:[#allocation5 + $0x100] sm:$0xf]
    %v309 = vld [vmem:[#allocation5 + $0x104] sm:$0xf]
    %v310 = vld [vmem:[#allocation5 + $0x108] sm:$0xf]
    %v311 = vld [vmem:[#allocation5 + $0x10c] sm:$0xf]
    %v312 = vld [vmem:[#allocation5 + $0x110] sm:$0xf]
    %v313 = vld [vmem:[#allocation5 + $0x114] sm:$0xf]
    %v314 = vld [vmem:[#allocation5 + $0x118] sm:$0xf]
    %v315 = vld [vmem:[#allocation5 + $0x11c] sm:$0xf]
    %v316 = vld [vmem:[#allocation5 + $0x120] sm:$0xf]
    %v317 = vld [vmem:[#allocation5 + $0x124] sm:$0xf]
    %v318 = vld [vmem:[#allocation5 + $0x128] sm:$0xf]
    %v319 = vld [vmem:[#allocation5 + $0x12c] sm:$0xf]
    %v320 = vld [vmem:[#allocation5 + $0x130] sm:$0xf]
    %v321 = vld [vmem:[#allocation5 + $0x134] sm:$0xf]
    %v322 = vld [vmem:[#allocation5 + $0x138] sm:$0xf]
    %v323 = vld [vmem:[#allocation5 + $0x13c] sm:$0xf]
    %v324 = vld [vmem:[#allocation5 + $0x140] sm:$0xf]
    %v325 = vld [vmem:[#allocation5 + $0x144] sm:$0xf]
    %v326 = vld [vmem:[#allocation5 + $0x148] sm:$0xf]
    %v327 = vld [vmem:[#allocation5 + $0x14c] sm:$0xf]
    %v328 = vld [vmem:[#allocation5 + $0x150] sm:$0xf]
    %v329 = vld [vmem:[#allocation5 + $0x154] sm:$0xf]
    %v330 = vld [vmem:[#allocation5 + $0x158] sm:$0xf]
    %v331 = vld [vmem:[#allocation5 + $0x15c] sm:$0xf]
    %v332 = vld [vmem:[#allocation5 + $0x160] sm:$0xf]
    %v333 = vld [vmem:[#allocation5 + $0x164] sm:$0xf]
    %v334 = vld [vmem:[#allocation5 + $0x168] sm:$0xf]
    %v335 = vld [vmem:[#allocation5 + $0x16c] sm:$0xf]
    %v336 = vld [vmem:[#allocation5 + $0x170] sm:$0xf]
    %v337 = vld [vmem:[#allocation5 + $0x174] sm:$0xf]
    %v338 = vld [vmem:[#allocation5 + $0x178] sm:$0xf]
    %v339 = vld [vmem:[#allocation5 + $0x17c] sm:$0xf]
    %v340 = vld [vmem:[#allocation5 + $0x180] sm:$0xf]
    %v341 = vld [vmem:[#allocation5 + $0x184] sm:$0xf]
    %v342 = vld [vmem:[#allocation5 + $0x188] sm:$0xf]
    %v343 = vld [vmem:[#allocation5 + $0x18c] sm:$0xf]
    %v344 = vld [vmem:[#allocation5 + $0x190] sm:$0xf]
    %v345 = vld [vmem:[#allocation5 + $0x194] sm:$0xf]
    %v346 = vld [vmem:[#allocation5 + $0x198] sm:$0xf]
    %v347 = vld [vmem:[#allocation5 + $0x19c] sm:$0xf]
    %v348 = vld [vmem:[#allocation5 + $0x1a0] sm:$0xf]
    %v349 = vld [vmem:[#allocation5 + $0x1a4] sm:$0xf]
    %v350 = vld [vmem:[#allocation5 + $0x1a8] sm:$0xf]
    %v351 = vld [vmem:[#allocation5 + $0x1ac] sm:$0xf]
    %v352 = vld [vmem:[#allocation5 + $0x1b0] sm:$0xf]
    %v353 = vld [vmem:[#allocation5 + $0x1b4] sm:$0xf]
    %v354 = vld [vmem:[#allocation5 + $0x1b8] sm:$0xf]
    %v355 = vld [vmem:[#allocation5 + $0x1bc] sm:$0xf]
    %v356 = vld [vmem:[#allocation5 + $0x1c0] sm:$0xf]
    %v357 = vld [vmem:[#allocation5 + $0x1c4] sm:$0xf]
    %v358 = vld [vmem:[#allocation5 + $0x1c8] sm:$0xf]
    %v359 = vld [vmem:[#allocation5 + $0x1cc] sm:$0xf]
    %v360 = vld [vmem:[#allocation5 + $0x1d0] sm:$0xf]
    %v361 = vld [vmem:[#allocation5 + $0x1d4] sm:$0xf]
    %v362 = vld [vmem:[#allocation5 + $0x1d8] sm:$0xf]
    %v363 = vld [vmem:[#allocation5 + $0x1dc] sm:$0xf]
    %v364 = vld [vmem:[#allocation5 + $0x1e0] sm:$0xf]
    %v365 = vld [vmem:[#allocation5 + $0x1e4] sm:$0xf]
    %v366 = vld [vmem:[#allocation5 + $0x1e8] sm:$0xf]
    %v367 = vld [vmem:[#allocation5 + $0x1ec] sm:$0xf]
    %v368 = vld [vmem:[#allocation5 + $0x1f0] sm:$0xf]
    %v369 = vld [vmem:[#allocation5 + $0x1f4] sm:$0xf]
    %v370 = vld [vmem:[#allocation5 + $0x1f8] sm:$0xf]
    %v371 = vld [vmem:[#allocation5 + $0x1fc] sm:$0xf]
    %v372 = vld [vmem:[%s2] sm:$0x1]
    %v374 = vlaneseq
    %v375 = vshrl.u32 %v374, 7
    %v376 = vsub.s32 0, %v375
    %v377 = vrot.slane %v372, %v376
    %v507 = vunpack.c.l.b16 %v244
    %v508 = vunpack.c.l.b16 %v245
    %v509 = vunpack.c.l.b16 %v246
    %v510 = vunpack.c.l.b16 %v247
    %v511 = vunpack.c.l.b16 %v248
    %v512 = vunpack.c.l.b16 %v249
    %v513 = vunpack.c.l.b16 %v250
    %v514 = vunpack.c.l.b16 %v251
    %v515 = vunpack.c.l.b16 %v252
    %v516 = vunpack.c.l.b16 %v253
    %v517 = vunpack.c.l.b16 %v254
    %v518 = vunpack.c.l.b16 %v255
    %v519 = vunpack.c.l.b16 %v256
    %v520 = vunpack.c.l.b16 %v257
    %v521 = vunpack.c.l.b16 %v258
    %v522 = vunpack.c.l.b16 %v259
    %v523 = vunpack.c.l.b16 %v260
    %v524 = vunpack.c.l.b16 %v261
    %v525 = vunpack.c.l.b16 %v262
    %v526 = vunpack.c.l.b16 %v263
    %v527 = vunpack.c.l.b16 %v264
    %v528 = vunpack.c.l.b16 %v265
    %v529 = vunpack.c.l.b16 %v266
    %v530 = vunpack.c.l.b16 %v267
    %v531 = vunpack.c.l.b16 %v268
    %v532 = vunpack.c.l.b16 %v269
    %v533 = vunpack.c.l.b16 %v270
    %v534 = vunpack.c.l.b16 %v271
    %v535 = vunpack.c.l.b16 %v272
    %v536 = vunpack.c.l.b16 %v273
    %v537 = vunpack.c.l.b16 %v274
    %v538 = vunpack.c.l.b16 %v275
    %v539 = vunpack.c.l.b16 %v276
    %v540 = vunpack.c.l.b16 %v277
    %v541 = vunpack.c.l.b16 %v278
    %v542 = vunpack.c.l.b16 %v279
    %v543 = vunpack.c.l.b16 %v280
    %v544 = vunpack.c.l.b16 %v281
    %v545 = vunpack.c.l.b16 %v282
    %v546 = vunpack.c.l.b16 %v283
    %v547 = vunpack.c.l.b16 %v284
    %v548 = vunpack.c.l.b16 %v285
    %v549 = vunpack.c.l.b16 %v286
    %v550 = vunpack.c.l.b16 %v287
    %v551 = vunpack.c.l.b16 %v288
    %v552 = vunpack.c.l.b16 %v289
    %v553 = vunpack.c.l.b16 %v290
    %v554 = vunpack.c.l.b16 %v291
    %v555 = vunpack.c.l.b16 %v292
    %v556 = vunpack.c.l.b16 %v293
    %v557 = vunpack.c.l.b16 %v294
    %v558 = vunpack.c.l.b16 %v295
    %v559 = vunpack.c.l.b16 %v296
    %v560 = vunpack.c.l.b16 %v297
    %v561 = vunpack.c.l.b16 %v298
    %v562 = vunpack.c.l.b16 %v299
    %v563 = vunpack.c.l.b16 %v300
    %v564 = vunpack.c.l.b16 %v301
    %v565 = vunpack.c.l.b16 %v302
    %v566 = vunpack.c.l.b16 %v303
    %v567 = vunpack.c.l.b16 %v304
    %v568 = vunpack.c.l.b16 %v305
    %v569 = vunpack.c.l.b16 %v306
    %v570 = vunpack.c.l.b16 %v307
    %v571 = vunpack.c.l.b16 %v308
    %v572 = vunpack.c.l.b16 %v309
    %v573 = vunpack.c.l.b16 %v310
    %v574 = vunpack.c.l.b16 %v311
    %v575 = vunpack.c.l.b16 %v312
    %v576 = vunpack.c.l.b16 %v313
    %v577 = vunpack.c.l.b16 %v314
    %v578 = vunpack.c.l.b16 %v315
    %v579 = vunpack.c.l.b16 %v316
    %v580 = vunpack.c.l.b16 %v317
    %v581 = vunpack.c.l.b16 %v318
    %v582 = vunpack.c.l.b16 %v319
    %v583 = vunpack.c.l.b16 %v320
    %v584 = vunpack.c.l.b16 %v321
    %v585 = vunpack.c.l.b16 %v322
    %v586 = vunpack.c.l.b16 %v323
    %v587 = vunpack.c.l.b16 %v324
    %v588 = vunpack.c.l.b16 %v325
    %v589 = vunpack.c.l.b16 %v326
    %v590 = vunpack.c.l.b16 %v327
    %v591 = vunpack.c.l.b16 %v328
    %v592 = vunpack.c.l.b16 %v329
    %v593 = vunpack.c.l.b16 %v330
    %v594 = vunpack.c.l.b16 %v331
    %v595 = vunpack.c.l.b16 %v332
    %v596 = vunpack.c.l.b16 %v333
    %v597 = vunpack.c.l.b16 %v334
    %v598 = vunpack.c.l.b16 %v335
    %v599 = vunpack.c.l.b16 %v336
    %v600 = vunpack.c.l.b16 %v337
    %v601 = vunpack.c.l.b16 %v338
    %v602 = vunpack.c.l.b16 %v339
    %v603 = vunpack.c.l.b16 %v340
    %v604 = vunpack.c.l.b16 %v341
    %v605 = vunpack.c.l.b16 %v342
    %v606 = vunpack.c.l.b16 %v343
    %v607 = vunpack.c.l.b16 %v344
    %v608 = vunpack.c.l.b16 %v345
    %v609 = vunpack.c.l.b16 %v346
    %v610 = vunpack.c.l.b16 %v347
    %v611 = vunpack.c.l.b16 %v348
    %v612 = vunpack.c.l.b16 %v349
    %v613 = vunpack.c.l.b16 %v350
    %v614 = vunpack.c.l.b16 %v351
    %v615 = vunpack.c.l.b16 %v352
    %v616 = vunpack.c.l.b16 %v353
    %v617 = vunpack.c.l.b16 %v354
    %v618 = vunpack.c.l.b16 %v355
    %v619 = vunpack.c.l.b16 %v356
    %v620 = vunpack.c.l.b16 %v357
    %v621 = vunpack.c.l.b16 %v358
    %v622 = vunpack.c.l.b16 %v359
    %v623 = vunpack.c.l.b16 %v360
    %v624 = vunpack.c.l.b16 %v361
    %v625 = vunpack.c.l.b16 %v362
    %v626 = vunpack.c.l.b16 %v363
    %v627 = vunpack.c.l.b16 %v364
    %v628 = vunpack.c.l.b16 %v365
    %v629 = vunpack.c.l.b16 %v366
    %v630 = vunpack.c.l.b16 %v367
    %v631 = vunpack.c.l.b16 %v368
    %v632 = vunpack.c.l.b16 %v369
    %v633 = vunpack.c.l.b16 %v370
    %v634 = vunpack.c.l.b16 %v371
    %v635 = vpack.c.b16 %v508, %v507
    %v636 = vpack.c.b16 %v510, %v509
    %v637 = vpack.c.b16 %v512, %v511
    %v638 = vpack.c.b16 %v514, %v513
    %v639 = vpack.c.b16 %v516, %v515
    %v640 = vpack.c.b16 %v518, %v517
    %v641 = vpack.c.b16 %v520, %v519
    %v642 = vpack.c.b16 %v522, %v521
    %v643 = vpack.c.b16 %v524, %v523
    %v644 = vpack.c.b16 %v526, %v525
    %v645 = vpack.c.b16 %v528, %v527
    %v646 = vpack.c.b16 %v530, %v529
    %v647 = vpack.c.b16 %v532, %v531
    %v648 = vpack.c.b16 %v534, %v533
    %v649 = vpack.c.b16 %v536, %v535
    %v650 = vpack.c.b16 %v538, %v537
    %v651 = vpack.c.b16 %v540, %v539
    %v652 = vpack.c.b16 %v542, %v541
    %v653 = vpack.c.b16 %v544, %v543
    %v654 = vpack.c.b16 %v546, %v545
    %v655 = vpack.c.b16 %v548, %v547
    %v656 = vpack.c.b16 %v550, %v549
    %v657 = vpack.c.b16 %v552, %v551
    %v658 = vpack.c.b16 %v554, %v553
    %v659 = vpack.c.b16 %v556, %v555
    %v660 = vpack.c.b16 %v558, %v557
    %v661 = vpack.c.b16 %v560, %v559
    %v662 = vpack.c.b16 %v562, %v561
    %v663 = vpack.c.b16 %v564, %v563
    %v664 = vpack.c.b16 %v566, %v565
    %v665 = vpack.c.b16 %v568, %v567
    %v666 = vpack.c.b16 %v570, %v569
    %v667 = vpack.c.b16 %v572, %v571
    %v668 = vpack.c.b16 %v574, %v573
    %v669 = vpack.c.b16 %v576, %v575
    %v670 = vpack.c.b16 %v578, %v577
    %v671 = vpack.c.b16 %v580, %v579
    %v672 = vpack.c.b16 %v582, %v581
    %v673 = vpack.c.b16 %v584, %v583
    %v674 = vpack.c.b16 %v586, %v585
    %v675 = vpack.c.b16 %v588, %v587
    %v676 = vpack.c.b16 %v590, %v589
    %v677 = vpack.c.b16 %v592, %v591
    %v678 = vpack.c.b16 %v594, %v593
    %v679 = vpack.c.b16 %v596, %v595
    %v680 = vpack.c.b16 %v598, %v597
    %v681 = vpack.c.b16 %v600, %v599
    %v682 = vpack.c.b16 %v602, %v601
    %v683 = vpack.c.b16 %v604, %v603
    %v684 = vpack.c.b16 %v606, %v605
    %v685 = vpack.c.b16 %v608, %v607
    %v686 = vpack.c.b16 %v610, %v609
    %v687 = vpack.c.b16 %v612, %v611
    %v688 = vpack.c.b16 %v614, %v613
    %v689 = vpack.c.b16 %v616, %v615
    %v690 = vpack.c.b16 %v618, %v617
    %v691 = vpack.c.b16 %v620, %v619
    %v692 = vpack.c.b16 %v622, %v621
    %v693 = vpack.c.b16 %v624, %v623
    %v694 = vpack.c.b16 %v626, %v625
    %v695 = vpack.c.b16 %v628, %v627
    %v696 = vpack.c.b16 %v630, %v629
    %v697 = vpack.c.b16 %v632, %v631
    %v698 = vpack.c.b16 %v634, %v633
    %763 = vmatprep.subr.bf16.mxu0 0
    %764 = vmatpush1.bf16.msra.mxu0 %v635
    %765 = vmatprep.subr.bf16.mxu0 0
    %766 = vmatpush1.bf16.msra.mxu0 %v636
    %767 = vmatprep.subr.bf16.mxu0 0
    %768 = vmatpush1.bf16.msra.mxu0 %v637
    %769 = vmatprep.subr.bf16.mxu0 0
    %770 = vmatpush1.bf16.msra.mxu0 %v638
    %771 = vmatprep.subr.bf16.mxu0 0
    %772 = vmatpush1.bf16.msra.mxu0 %v639
    %773 = vmatprep.subr.bf16.mxu0 0
    %774 = vmatpush1.bf16.msra.mxu0 %v640
    %775 = vmatprep.subr.bf16.mxu0 0
    %776 = vmatpush1.bf16.msra.mxu0 %v641
    %777 = vmatprep.subr.bf16.mxu0 0
    %778 = vmatpush1.bf16.msra.mxu0 %v642
    %779 = vmatprep.subr.bf16.mxu0 0
    %780 = vmatpush1.bf16.msra.mxu0 %v643
    %781 = vmatprep.subr.bf16.mxu0 0
    %782 = vmatpush1.bf16.msra.mxu0 %v644
    %783 = vmatprep.subr.bf16.mxu0 0
    %784 = vmatpush1.bf16.msra.mxu0 %v645
    %785 = vmatprep.subr.bf16.mxu0 0
    %786 = vmatpush1.bf16.msra.mxu0 %v646
    %787 = vmatprep.subr.bf16.mxu0 0
    %788 = vmatpush1.bf16.msra.mxu0 %v647
    %789 = vmatprep.subr.bf16.mxu0 0
    %790 = vmatpush1.bf16.msra.mxu0 %v648
    %791 = vmatprep.subr.bf16.mxu0 0
    %792 = vmatpush1.bf16.msra.mxu0 %v649
    %793 = vmatprep.subr.bf16.mxu0 0
    %794 = vmatpush1.bf16.msra.mxu0 %v650
    %795 = vmatprep.mubr.bf16.mxu0 %v237
    %796 = vmatmul.mubr.bf16.gmra.mrb[0].mxu0 %v236
    %v797 = vpop.f32.mrb[0].mxu0
    %v798 = vadd.f32 %v377, %v797
    %v799 = vpop.f32.mrb[0].mxu0
    %v800 = vpop.f32.mrb[0].mxu0
    %v801 = vadd.f32 %v377, %v800
    %v802 = vpop.f32.mrb[0].mxu0
    %803 = vdwg.mxu0
    %804 = vmatprep.subr.bf16.mxu0 0
    %805 = vmatpush1.bf16.msra.mxu0 %v651
    %806 = vmatprep.subr.bf16.mxu0 0
    %807 = vmatpush1.bf16.msra.mxu0 %v652
    %808 = vmatprep.subr.bf16.mxu0 0
    %809 = vmatpush1.bf16.msra.mxu0 %v653
    %810 = vmatprep.subr.bf16.mxu0 0
    %811 = vmatpush1.bf16.msra.mxu0 %v654
    %812 = vmatprep.subr.bf16.mxu0 0
    %813 = vmatpush1.bf16.msra.mxu0 %v655
    %814 = vmatprep.subr.bf16.mxu0 0
    %815 = vmatpush1.bf16.msra.mxu0 %v656
    %816 = vmatprep.subr.bf16.mxu0 0
    %817 = vmatpush1.bf16.msra.mxu0 %v657
    %818 = vmatprep.subr.bf16.mxu0 0
    %819 = vmatpush1.bf16.msra.mxu0 %v658
    %820 = vmatprep.subr.bf16.mxu0 0
    %821 = vmatpush1.bf16.msra.mxu0 %v659
    %822 = vmatprep.subr.bf16.mxu0 0
    %823 = vmatpush1.bf16.msra.mxu0 %v660
    %824 = vmatprep.subr.bf16.mxu0 0
    %825 = vmatpush1.bf16.msra.mxu0 %v661
    %826 = vmatprep.subr.bf16.mxu0 0
    %827 = vmatpush1.bf16.msra.mxu0 %v662
    %828 = vmatprep.subr.bf16.mxu0 0
    %829 = vmatpush1.bf16.msra.mxu0 %v663
    %830 = vmatprep.subr.bf16.mxu0 0
    %831 = vmatpush1.bf16.msra.mxu0 %v664
    %832 = vmatprep.subr.bf16.mxu0 0
    %833 = vmatpush1.bf16.msra.mxu0 %v665
    %834 = vmatprep.subr.bf16.mxu0 0
    %835 = vmatpush1.bf16.msra.mxu0 %v666
    %836 = vmatprep.mubr.bf16.mxu0 %v239
    %837 = vmatmul.mubr.bf16.gmra.mrb[0].mxu0 %v238
    %v838 = vpop.f32.mrb[0].mxu0
    %v839 = vadd.f32 %v798, %v838
    %v840 = vpop.f32.mrb[0].mxu0
    %v841 = vpop.f32.mrb[0].mxu0
    %v842 = vadd.f32 %v801, %v841
    %v843 = vpop.f32.mrb[0].mxu0
    %844 = vdwg.mxu0
    %845 = vmatprep.subr.bf16.mxu0 0
    %846 = vmatpush1.bf16.msra.mxu0 %v667
    %847 = vmatprep.subr.bf16.mxu0 0
    %848 = vmatpush1.bf16.msra.mxu0 %v668
    %849 = vmatprep.subr.bf16.mxu0 0
    %850 = vmatpush1.bf16.msra.mxu0 %v669
    %851 = vmatprep.subr.bf16.mxu0 0
    %852 = vmatpush1.bf16.msra.mxu0 %v670
    %853 = vmatprep.subr.bf16.mxu0 0
    %854 = vmatpush1.bf16.msra.mxu0 %v671
    %855 = vmatprep.subr.bf16.mxu0 0
    %856 = vmatpush1.bf16.msra.mxu0 %v672
    %857 = vmatprep.subr.bf16.mxu0 0
    %858 = vmatpush1.bf16.msra.mxu0 %v673
    %859 = vmatprep.subr.bf16.mxu0 0
    %860 = vmatpush1.bf16.msra.mxu0 %v674
    %861 = vmatprep.subr.bf16.mxu0 0
    %862 = vmatpush1.bf16.msra.mxu0 %v675
    %863 = vmatprep.subr.bf16.mxu0 0
    %864 = vmatpush1.bf16.msra.mxu0 %v676
    %865 = vmatprep.subr.bf16.mxu0 0
    %866 = vmatpush1.bf16.msra.mxu0 %v677
    %867 = vmatprep.subr.bf16.mxu0 0
    %868 = vmatpush1.bf16.msra.mxu0 %v678
    %869 = vmatprep.subr.bf16.mxu0 0
    %870 = vmatpush1.bf16.msra.mxu0 %v679
    %871 = vmatprep.subr.bf16.mxu0 0
    %872 = vmatpush1.bf16.msra.mxu0 %v680
    %873 = vmatprep.subr.bf16.mxu0 0
    %874 = vmatpush1.bf16.msra.mxu0 %v681
    %875 = vmatprep.subr.bf16.mxu0 0
    %876 = vmatpush1.bf16.msra.mxu0 %v682
    %877 = vmatprep.mubr.bf16.mxu0 %v241
    %878 = vmatmul.mubr.bf16.gmra.mrb[0].mxu0 %v240
    %v879 = vpop.f32.mrb[0].mxu0
    %v880 = vadd.f32 %v839, %v879
    %v881 = vpop.f32.mrb[0].mxu0
    %v882 = vpop.f32.mrb[0].mxu0
    %v883 = vadd.f32 %v842, %v882
    %v884 = vpop.f32.mrb[0].mxu0
    %885 = vdwg.mxu0
    %886 = vmatprep.subr.bf16.mxu0 0
    %887 = vmatpush1.bf16.msra.mxu0 %v683
    %888 = vmatprep.subr.bf16.mxu0 0
    %889 = vmatpush1.bf16.msra.mxu0 %v684
    %890 = vmatprep.subr.bf16.mxu0 0
    %891 = vmatpush1.bf16.msra.mxu0 %v685
    %892 = vmatprep.subr.bf16.mxu0 0
    %893 = vmatpush1.bf16.msra.mxu0 %v686
    %894 = vmatprep.subr.bf16.mxu0 0
    %895 = vmatpush1.bf16.msra.mxu0 %v687
    %896 = vmatprep.subr.bf16.mxu0 0
    %897 = vmatpush1.bf16.msra.mxu0 %v688
    %898 = vmatprep.subr.bf16.mxu0 0
    %899 = vmatpush1.bf16.msra.mxu0 %v689
    %900 = vmatprep.subr.bf16.mxu0 0
    %901 = vmatpush1.bf16.msra.mxu0 %v690
    %902 = vmatprep.subr.bf16.mxu0 0
    %903 = vmatpush1.bf16.msra.mxu0 %v691
    %904 = vmatprep.subr.bf16.mxu0 0
    %905 = vmatpush1.bf16.msra.mxu0 %v692
    %906 = vmatprep.subr.bf16.mxu0 0
    %907 = vmatpush1.bf16.msra.mxu0 %v693
    %908 = vmatprep.subr.bf16.mxu0 0
    %909 = vmatpush1.bf16.msra.mxu0 %v694
    %910 = vmatprep.subr.bf16.mxu0 0
    %911 = vmatpush1.bf16.msra.mxu0 %v695
    %912 = vmatprep.subr.bf16.mxu0 0
    %913 = vmatpush1.bf16.msra.mxu0 %v696
    %914 = vmatprep.subr.bf16.mxu0 0
    %915 = vmatpush1.bf16.msra.mxu0 %v697
    %916 = vmatprep.subr.bf16.mxu0 0
    %917 = vmatpush1.bf16.msra.mxu0 %v698
    %918 = vmatprep.mubr.bf16.mxu0 %v243
    %919 = vmatmul.mubr.bf16.gmra.mrb[0].mxu0 %v242
    %v920 = vpop.f32.mrb[0].mxu0
    %v921 = vadd.f32 %v880, %v920
    %v922 = vpop.f32.mrb[0].mxu0
    %v923 = vpop.f32.mrb[0].mxu0
    %v924 = vadd.f32 %v883, %v923
    %v925 = vpop.f32.mrb[0].mxu0
    %926 = vdwg.mxu0
    %927 = vmax.xlane.f32.xlu0 %v921
    %v928 = vpop.xlane.xlu0 %927
    %929 = vmax.xlane.f32.xlu0 %v924
    %v930 = vpop.xlane.xlu0 %929
    %v931 = vsub.f32 %v921, %v928
    %v932 = vsub.f32 %v924, %v930
    %v933 = vmul.f32 %v931, 1.442695
    %v934 = vpow.pop %v933
    %v935 = vmul.f32 %v932, 1.442695
    %v936 = vpow.pop %v935
    %937 = vadd.xlane.f32.xlu0 %v934
    %v938 = vpop.xlane.xlu0 %937
    %939 = vadd.xlane.f32.xlu0 %v936
    %v940 = vpop.xlane.xlu0 %939
    %v941 = vlog2.pop %v938
    %v942 = vmul.f32 %v941, 0.6931472
    %v943 = vlog2.pop %v940
    %v944 = vmul.f32 %v943, 0.6931472
    %v945 = vsub.f32 %v931, %v942
    %v946 = vsub.f32 %v932, %v944
    %947 = vst [vmem:[#allocation7] sm:$0xff] %v945
    %948 = vst [vmem:[#allocation7 + $0x8] sm:$0xff] %v946
    // Predicated region
    $region22: #{tpu_custom_call.1} parent=1 // pred_check
      _
    $region23: #{tpu_custom_call.1} parent=1 // pred_check_branch
      %950 = sbr.rel (0) target = $region25
    $region24: #{tpu_custom_call.1} parent=1 // pred_region
      %s952 = ssub.s32 256, 32
      %953 = vsyncadd [#allocation4], %s952
      %s954 = sshll.u32 [#allocation7], 4
      %s955 = int_to_ptr.vmem [resolvable:$true] %s954
      %960 = dma.vmem_to_hbm [thread:$0]  %s955, 32, %s3, [#allocation4], 32, 32, 2
    $region25: #{tpu_custom_call.1} parent=1 // pred_fallthru
      _
    // Predicated region
    $region26: #{tpu_custom_call.1} parent=1 // pred_check
      _
    $region27: #{tpu_custom_call.1} parent=1 // pred_check_branch
      %962 = sbr.rel (0) target = $region29
    $region28: #{tpu_custom_call.1} parent=1 // pred_region
      %963 = dma.done [#allocation4], 256
    $region29: #{tpu_custom_call.1} parent=1 // pred_fallthru
      _
    %964 = vsyncpa [#allocation3], 1
    %965 = vsyncpa [#allocation6], 1
    %966 = vsyncpa [#allocation4], 1

</llo_original>
